<compile_context>
chip_gen: v6e
topology: v6e:2x2x1
jax: 0.10.0
libtpu: 0.0.40
codegen_flags: <defaults>
</compile_context>

<pallas_src>
import functools

import jax
import jax.numpy as jnp
from jax import lax
from jax.experimental import pallas as pl
from jax.experimental.pallas import tpu as pltpu

KERNEL_SIZE = 3
CONV1_FILTERS = 16
CONV2_FILTERS = 32
FC1_OUT = 24


def _segment_bounds(sizes, L2):
    """torch.tensor_split(x, sizes, dim=2) semantics with empty splits dropped."""
    bounds = [0] + [int(s) for s in sizes] + [L2]
    starts, ends = [], []
    for a, b in zip(bounds[:-1], bounds[1:]):
        a = max(0, min(a, L2))
        b = max(0, min(b, L2))
        if b > a:
            starts.append(a)
            ends.append(b)
    return starts, ends


def _fused_kernel(x_ref, w1_ref, b1_ref, w2_ref, b2_ref,
                  fw1_ref, fb1_ref, fw2_ref, fb2_ref, out_ref,
                  *, n_batch, length, starts, ends):
    """conv1+relu+conv2+relu+segment-max+fc1+relu+fc2 for the whole batch.

    x_ref  : (N*L, C_in)      VMEM  channels-last, batch flattened into rows
    w1_ref : (K, C_in, C1)    VMEM  (torch conv weight transposed)
    b1_ref : (1, C1)          VMEM
    w2_ref : (K, C1, C2)      VMEM
    b2_ref : (1, C2)          VMEM
    fw1_ref: (C2, FC1_OUT)    VMEM  (torch linear weight transposed)
    fb1_ref: (1, FC1_OUT)     VMEM
    fw2_ref: (FC1_OUT, n_out) VMEM
    fb2_ref: (1, n_out)       VMEM
    out_ref: (S*N, n_out)     VMEM  final logits, row = s*N + n
    starts/ends: static per-segment [start, end) bounds on the conv2 time axis.
    """
    K = w1_ref.shape[0]
    NL = x_ref.shape[0]          # = n_batch * length

    x = x_ref[...]                                             # (NL, C_in)

    # conv1 (valid, stride 1): K tap matmuls on the FULL (unsliced) input; the
    # per-tap row alignment is a sublane roll of the narrow (C1-lane) result on
    # the XLU, i.e. out[j] = sum_k (x @ w1[k])[j + k].  shift = NL - k is the
    # non-negative equivalent of rolling by -k.  Rows whose window crosses a
    # batch boundary (or wraps) are finite garbage and are never pooled.
    acc1 = jnp.dot(x, w1_ref[0], preferred_element_type=jnp.float32)
    for k in range(1, K):
        tap = jnp.dot(x, w1_ref[k], preferred_element_type=jnp.float32)
        acc1 = acc1 + pltpu.roll(tap, NL - k, axis=0)
    # Bias added AFTER the pure-matmul accumulation chain.
    h1 = jnp.maximum(acc1 + b1_ref[...], 0.0)                  # (NL, C1)

    # conv2 + ReLU (same structure).
    acc2 = jnp.dot(h1, w2_ref[0], preferred_element_type=jnp.float32)
    for k in range(1, K):
        tap = jnp.dot(h1, w2_ref[k], preferred_element_type=jnp.float32)
        acc2 = acc2 + pltpu.roll(tap, NL - k, axis=0)
    h2 = jnp.maximum(acc2 + b2_ref[...], 0.0)                  # (NL, C2)

    # Per-segment AdaptiveMaxPool1d(1): leading-axis split (N, L, C2) then one
    # static-slice max over the time axis per segment.  Segment ends are
    # <= L2 = L - 2*(K-1), so conv-tail / batch-boundary garbage rows are never
    # selected.  Concatenating the per-segment (N, C2) blocks gives row order
    # s*N + n, matching torch.stack(y).view(-1, C2).
    C2 = h2.shape[1]
    h2_nlc = h2.reshape(n_batch, length, C2)
    feats = [jnp.max(h2_nlc[:, a:b, :], axis=1)                # (N, C2) each
             for a, b in zip(starts, ends)]
    feat = jnp.concatenate(feats, axis=0)                      # (S*N, C2)

    # fc1 + ReLU + fc2 fused in the same body (no second launch / HBM roundtrip).
    hfc = jnp.maximum(
        jnp.dot(feat, fw1_ref[...], preferred_element_type=jnp.float32)
        + fb1_ref[...], 0.0)
    # NOTE: output last dim is n_out=1 -> one tiny masked store; lane-padding it
    # only pays off once S*N reaches production sizes (see perf review).
    out_ref[...] = (jnp.dot(hfc, fw2_ref[...],
                            preferred_element_type=jnp.float32) + fb2_ref[...])


def prepare_params(params):
    """One-time (load-time) parameter re-layout for the fused kernel.

    torch Conv1d weight (C_out, C_in, K) -> (K, C_in, C_out);
    torch Linear weight (out, in)        -> (in, out);
    biases -> (1, n) rows.  Called once, OUTSIDE the per-call jitted path.
    """
    w1, b1, w2, b2, fw1, fb1, fw2, fb2 = params
    return (jnp.transpose(w1, (2, 1, 0)).astype(jnp.float32),
            b1.reshape(1, -1).astype(jnp.float32),
            jnp.transpose(w2, (2, 1, 0)).astype(jnp.float32),
            b2.reshape(1, -1).astype(jnp.float32),
            fw1.T.astype(jnp.float32),
            fb1.reshape(1, -1).astype(jnp.float32),
            fw2.T.astype(jnp.float32),
            fb2.reshape(1, -1).astype(jnp.float32))


def feature_cnn2_forward(x_ncl, sizes, prepared):
    """FeatureCNN2.forward for add_layers=False, ncov=0.

    x_ncl: (N, C_in, L); sizes: static tensor_split indices; prepared: output
    of prepare_params() (pre-transposed weights, done once at load time).
    """
    w1_t, b1r, w2_t, b2r, fw1_t, fb1r, fw2_t, fb2r = prepared
    N, C_in, L = x_ncl.shape
    K = w1_t.shape[0]
    L2 = L - 2 * (K - 1)

    starts, ends = _segment_bounds(sizes, L2)
    S = len(starts)
    n_out = fw2_t.shape[1]

    # NCL -> NLC (channels on the lane axis), flatten batch into rows
    # (flat row = n*L + t).  This is the only per-call data-layout op left.
    # TODO(synk): accept NLC layout upstream to drop this XLA transpose too.
    x_flat = jnp.transpose(x_ncl, (0, 2, 1)).reshape(N * L, C_in).astype(jnp.float32)

    kernel = functools.partial(_fused_kernel, n_batch=N, length=L,
                               starts=tuple(starts), ends=tuple(ends))

    # Single fused, grid-less pallas_call: default (whole-array) BlockSpecs put
    # every operand/output fully in VMEM (KB-scale on every TPU generation, so
    # no vmem_limit_bytes override is needed at these shapes).
    return pl.pallas_call(
        kernel,
        out_shape=jax.ShapeDtypeStruct((S * N, n_out), jnp.float32),
    )(x_flat, w1_t, b1r, w2_t, b2r, fw1_t, fb1r, fw2_t, fb2r)


def reference_forward(x_ncl, sizes, params):
    """Pure-JAX reference mirroring the PyTorch forward (NCL layout)."""
    w1, b1, w2, b2, fw1, fb1, fw2, fb2 = params

    def conv1d(x, w, b):
        y = lax.conv_general_dilated(x, w, (1,), 'VALID',
                                     dimension_numbers=('NCH', 'OIH', 'NCH'))
        return y + b[None, :, None]

    h = jax.nn.relu(conv1d(x_ncl.astype(jnp.float32), w1, b1))
    h = jax.nn.relu(conv1d(h, w2, b2))
    L2 = h.shape[2]
    starts, ends = _segment_bounds(sizes, L2)
    ys = [jnp.max(h[:, :, a:b], axis=2) for a, b in zip(starts, ends)]  # (N, C2) each
    feat = jnp.stack(ys, axis=0).reshape(-1, h.shape[1])
    hfc = jax.nn.relu(feat @ fw1.T + fb1)
    return hfc @ fw2.T + fb2


if __name__ == "__main__":
    # Small, module-consistent shapes: batch=2, input_channels=64, length=16.
    N, C_IN, L = 2, 64, 16
    N_OUT = 1
    key = jax.random.PRNGKey(0)
    ks = jax.random.split(key, 9)

    w1 = 0.1 * jax.random.normal(ks[0], (CONV1_FILTERS, C_IN, KERNEL_SIZE), jnp.float32)
    b1 = 0.1 * jax.random.normal(ks[1], (CONV1_FILTERS,), jnp.float32)
    w2 = 0.1 * jax.random.normal(ks[2], (CONV2_FILTERS, CONV1_FILTERS, KERNEL_SIZE), jnp.float32)
    b2 = 0.1 * jax.random.normal(ks[3], (CONV2_FILTERS,), jnp.float32)
    fw1 = 0.1 * jax.random.normal(ks[4], (FC1_OUT, CONV2_FILTERS), jnp.float32)
    fb1 = 0.1 * jax.random.normal(ks[5], (FC1_OUT,), jnp.float32)
    fw2 = 0.1 * jax.random.normal(ks[6], (N_OUT, FC1_OUT), jnp.float32)
    fb2 = 0.1 * jax.random.normal(ks[7], (N_OUT,), jnp.float32)
    params = (w1, b1, w2, b2, fw1, fb1, fw2, fb2)

    x = jax.random.normal(ks[8], (N, C_IN, L), jnp.float32)
    # tensor_split indices along the (conv2-output) length axis; middle split is
    # empty and is skipped, matching the `nelement() != 0` filter in PyTorch.
    sizes = (4, 4, 9)

    # Parameter re-layout happens ONCE here (load time), not per call.
    prepared = prepare_params(params)

    fwd = jax.jit(feature_cnn2_forward, static_argnums=1)
    out = fwd(x, sizes, prepared)
    out = jax.block_until_ready(out)

    ref = reference_forward(x, sizes, params)
    ref = jax.block_until_ready(ref)

    assert out.shape == ref.shape, (out.shape, ref.shape)
    assert jnp.allclose(out, ref, rtol=1e-4, atol=1e-4), (
        float(jnp.max(jnp.abs(out - ref))))
    print("KERNEL_OK")
</pallas_src>

<mosaic_0001>
module attributes {stable_mosaic.version = 11 : i64} {
  func.func @_fused_kernel(%arg0: memref<32x64xf32, #tpu.memory_space<vmem>>, %arg1: memref<3x64x16xf32, #tpu.memory_space<vmem>>, %arg2: memref<1x16xf32, #tpu.memory_space<vmem>>, %arg3: memref<3x16x32xf32, #tpu.memory_space<vmem>>, %arg4: memref<1x32xf32, #tpu.memory_space<vmem>>, %arg5: memref<32x24xf32, #tpu.memory_space<vmem>>, %arg6: memref<1x24xf32, #tpu.memory_space<vmem>>, %arg7: memref<24x1xf32, #tpu.memory_space<vmem>>, %arg8: memref<1x1xf32, #tpu.memory_space<vmem>>, %arg9: memref<6x1xf32, #tpu.memory_space<vmem>>) attributes {dimension_semantics = [], scalar_prefetch = 0 : i64, scratch_operands = 0 : i64, tpu.core_type = #tpu.core_type<tc>} {
    %c0 = arith.constant 0 : index
    %c0_0 = arith.constant 0 : index
    %0 = vector.load %arg0[%c0, %c0_0] : memref<32x64xf32, #tpu.memory_space<vmem>>, vector<32x64xf32>
    %c0_1 = arith.constant 0 : index
    %c0_2 = arith.constant 0 : index
    %c0_3 = arith.constant 0 : index
    %1 = vector.load %arg1[%c0_1, %c0_2, %c0_3] : memref<3x64x16xf32, #tpu.memory_space<vmem>>, vector<1x64x16xf32>
    %2 = vector.shape_cast %1 : vector<1x64x16xf32> to vector<64x16xf32>
    %cst = arith.constant dense<0.000000e+00> : vector<32x16xf32>
    %3 = tpu.matmul %0, %2, %cst {dimension_numbers = #tpu.dot_dimension_numbers<[1], [0], [0], [1], [0, 0, 1, 1], [], []>} : vector<32x64xf32>, vector<64x16xf32>, vector<32x16xf32> -> vector<32x16xf32>
    %c1 = arith.constant 1 : index
    %c0_4 = arith.constant 0 : index
    %c0_5 = arith.constant 0 : index
    %4 = vector.load %arg1[%c1, %c0_4, %c0_5] : memref<3x64x16xf32, #tpu.memory_space<vmem>>, vector<1x64x16xf32>
    %5 = vector.shape_cast %4 : vector<1x64x16xf32> to vector<64x16xf32>
    %cst_6 = arith.constant dense<0.000000e+00> : vector<32x16xf32>
    %6 = tpu.matmul %0, %5, %cst_6 {dimension_numbers = #tpu.dot_dimension_numbers<[1], [0], [0], [1], [0, 0, 1, 1], [], []>} : vector<32x64xf32>, vector<64x16xf32>, vector<32x16xf32> -> vector<32x16xf32>
    %c31_i32 = arith.constant 31 : i32
    %7 = tpu.dynamic_rotate %6 by %c31_i32 dim 0 : vector<32x16xf32>, i32 -> vector<32x16xf32>
    %8 = arith.addf %3, %7 : vector<32x16xf32>
    %c2 = arith.constant 2 : index
    %c0_7 = arith.constant 0 : index
    %c0_8 = arith.constant 0 : index
    %9 = vector.load %arg1[%c2, %c0_7, %c0_8] : memref<3x64x16xf32, #tpu.memory_space<vmem>>, vector<1x64x16xf32>
    %10 = vector.shape_cast %9 : vector<1x64x16xf32> to vector<64x16xf32>
    %cst_9 = arith.constant dense<0.000000e+00> : vector<32x16xf32>
    %11 = tpu.matmul %0, %10, %cst_9 {dimension_numbers = #tpu.dot_dimension_numbers<[1], [0], [0], [1], [0, 0, 1, 1], [], []>} : vector<32x64xf32>, vector<64x16xf32>, vector<32x16xf32> -> vector<32x16xf32>
    %c30_i32 = arith.constant 30 : i32
    %12 = tpu.dynamic_rotate %11 by %c30_i32 dim 0 : vector<32x16xf32>, i32 -> vector<32x16xf32>
    %13 = arith.addf %8, %12 : vector<32x16xf32>
    %c0_10 = arith.constant 0 : index
    %c0_11 = arith.constant 0 : index
    %14 = vector.load %arg2[%c0_10, %c0_11] : memref<1x16xf32, #tpu.memory_space<vmem>>, vector<1x16xf32>
    %15 = vector.broadcast %14 : vector<1x16xf32> to vector<32x16xf32>
    %16 = arith.addf %13, %15 : vector<32x16xf32>
    %cst_12 = arith.constant 0.000000e+00 : f32
    %17 = vector.broadcast %cst_12 : f32 to vector<32x16xf32>
    %18 = arith.maximumf %16, %17 : vector<32x16xf32>
    %c0_13 = arith.constant 0 : index
    %c0_14 = arith.constant 0 : index
    %c0_15 = arith.constant 0 : index
    %19 = vector.load %arg3[%c0_13, %c0_14, %c0_15] : memref<3x16x32xf32, #tpu.memory_space<vmem>>, vector<1x16x32xf32>
    %20 = vector.shape_cast %19 : vector<1x16x32xf32> to vector<16x32xf32>
    %cst_16 = arith.constant dense<0.000000e+00> : vector<32x32xf32>
    %21 = tpu.matmul %18, %20, %cst_16 {dimension_numbers = #tpu.dot_dimension_numbers<[1], [0], [0], [1], [0, 0, 1, 1], [], []>} : vector<32x16xf32>, vector<16x32xf32>, vector<32x32xf32> -> vector<32x32xf32>
    %c1_17 = arith.constant 1 : index
    %c0_18 = arith.constant 0 : index
    %c0_19 = arith.constant 0 : index
    %22 = vector.load %arg3[%c1_17, %c0_18, %c0_19] : memref<3x16x32xf32, #tpu.memory_space<vmem>>, vector<1x16x32xf32>
    %23 = vector.shape_cast %22 : vector<1x16x32xf32> to vector<16x32xf32>
    %cst_20 = arith.constant dense<0.000000e+00> : vector<32x32xf32>
    %24 = tpu.matmul %18, %23, %cst_20 {dimension_numbers = #tpu.dot_dimension_numbers<[1], [0], [0], [1], [0, 0, 1, 1], [], []>} : vector<32x16xf32>, vector<16x32xf32>, vector<32x32xf32> -> vector<32x32xf32>
    %c31_i32_21 = arith.constant 31 : i32
    %25 = tpu.dynamic_rotate %24 by %c31_i32_21 dim 0 : vector<32x32xf32>, i32 -> vector<32x32xf32>
    %26 = arith.addf %21, %25 : vector<32x32xf32>
    %c2_22 = arith.constant 2 : index
    %c0_23 = arith.constant 0 : index
    %c0_24 = arith.constant 0 : index
    %27 = vector.load %arg3[%c2_22, %c0_23, %c0_24] : memref<3x16x32xf32, #tpu.memory_space<vmem>>, vector<1x16x32xf32>
    %28 = vector.shape_cast %27 : vector<1x16x32xf32> to vector<16x32xf32>
    %cst_25 = arith.constant dense<0.000000e+00> : vector<32x32xf32>
    %29 = tpu.matmul %18, %28, %cst_25 {dimension_numbers = #tpu.dot_dimension_numbers<[1], [0], [0], [1], [0, 0, 1, 1], [], []>} : vector<32x16xf32>, vector<16x32xf32>, vector<32x32xf32> -> vector<32x32xf32>
    %c30_i32_26 = arith.constant 30 : i32
    %30 = tpu.dynamic_rotate %29 by %c30_i32_26 dim 0 : vector<32x32xf32>, i32 -> vector<32x32xf32>
    %31 = arith.addf %26, %30 : vector<32x32xf32>
    %c0_27 = arith.constant 0 : index
    %c0_28 = arith.constant 0 : index
    %32 = vector.load %arg4[%c0_27, %c0_28] : memref<1x32xf32, #tpu.memory_space<vmem>>, vector<1x32xf32>
    %33 = vector.broadcast %32 : vector<1x32xf32> to vector<32x32xf32>
    %34 = arith.addf %31, %33 : vector<32x32xf32>
    %cst_29 = arith.constant 0.000000e+00 : f32
    %35 = vector.broadcast %cst_29 : f32 to vector<32x32xf32>
    %36 = arith.maximumf %34, %35 : vector<32x32xf32>
    %37 = vector.shape_cast %36 : vector<32x32xf32> to vector<2x16x32xf32>
    %38 = vector.extract_strided_slice %37 {offsets = [0, 0, 0], sizes = [2, 4, 32], strides = [1, 1, 1]} : vector<2x16x32xf32> to vector<2x4x32xf32>
    %cst_30 = arith.constant dense<0xFF800000> : vector<2x32xf32>
    %39 = vector.multi_reduction <maximumf>, %38, %cst_30 [1] : vector<2x4x32xf32> to vector<2x32xf32>
    %40 = vector.extract_strided_slice %37 {offsets = [0, 4, 0], sizes = [2, 5, 32], strides = [1, 1, 1]} : vector<2x16x32xf32> to vector<2x5x32xf32>
    %cst_31 = arith.constant dense<0xFF800000> : vector<2x32xf32>
    %41 = vector.multi_reduction <maximumf>, %40, %cst_31 [1] : vector<2x5x32xf32> to vector<2x32xf32>
    %42 = vector.extract_strided_slice %37 {offsets = [0, 9, 0], sizes = [2, 3, 32], strides = [1, 1, 1]} : vector<2x16x32xf32> to vector<2x3x32xf32>
    %cst_32 = arith.constant dense<0xFF800000> : vector<2x32xf32>
    %43 = vector.multi_reduction <maximumf>, %42, %cst_32 [1] : vector<2x3x32xf32> to vector<2x32xf32>
    %44 = tpu.concatenate %39, %41, %43 in 0 : vector<2x32xf32>, vector<2x32xf32>, vector<2x32xf32> -> vector<6x32xf32>
    %c0_33 = arith.constant 0 : index
    %c0_34 = arith.constant 0 : index
    %45 = vector.load %arg5[%c0_33, %c0_34] : memref<32x24xf32, #tpu.memory_space<vmem>>, vector<32x24xf32>
    %cst_35 = arith.constant dense<0.000000e+00> : vector<6x24xf32>
    %46 = tpu.matmul %44, %45, %cst_35 {dimension_numbers = #tpu.dot_dimension_numbers<[1], [0], [0], [1], [0, 0, 1, 1], [], []>} : vector<6x32xf32>, vector<32x24xf32>, vector<6x24xf32> -> vector<6x24xf32>
    %c0_36 = arith.constant 0 : index
    %c0_37 = arith.constant 0 : index
    %47 = vector.load %arg6[%c0_36, %c0_37] : memref<1x24xf32, #tpu.memory_space<vmem>>, vector<1x24xf32>
    %48 = vector.broadcast %47 : vector<1x24xf32> to vector<6x24xf32>
    %49 = arith.addf %46, %48 : vector<6x24xf32>
    %cst_38 = arith.constant 0.000000e+00 : f32
    %50 = vector.broadcast %cst_38 : f32 to vector<6x24xf32>
    %51 = arith.maximumf %49, %50 : vector<6x24xf32>
    %c0_39 = arith.constant 0 : index
    %c0_40 = arith.constant 0 : index
    %52 = vector.load %arg7[%c0_39, %c0_40] : memref<24x1xf32, #tpu.memory_space<vmem>>, vector<24x1xf32>
    %cst_41 = arith.constant dense<0.000000e+00> : vector<6x1xf32>
    %53 = tpu.matmul %51, %52, %cst_41 {dimension_numbers = #tpu.dot_dimension_numbers<[1], [0], [0], [1], [0, 0, 1, 1], [], []>} : vector<6x24xf32>, vector<24x1xf32>, vector<6x1xf32> -> vector<6x1xf32>
    %c0_42 = arith.constant 0 : index
    %c0_43 = arith.constant 0 : index
    %54 = vector.load %arg8[%c0_42, %c0_43] : memref<1x1xf32, #tpu.memory_space<vmem>>, vector<1x1xf32>
    %55 = vector.broadcast %54 : vector<1x1xf32> to vector<6x1xf32>
    %56 = arith.addf %53, %55 : vector<6x1xf32>
    %c0_44 = arith.constant 0 : index
    %c0_45 = arith.constant 0 : index
    %57 = vector.load %arg9[%c0_44, %c0_45] : memref<6x1xf32, #tpu.memory_space<vmem>>, vector<6x1xf32>
    tpu.vector_store %arg9[%c0_44, %c0_45], %56 {strides = array<i32>} : memref<6x1xf32, #tpu.memory_space<vmem>>, vector<6x1xf32>,
    return
  }
}

</mosaic_0001>

<llo_original>
// kernel: feature_cnn2_forward.1
$region0: #{feature_cnn2_forward.1}
  #allocation0 [shape = 'u32[]', space=smem, size = 0x4, offset = 0x4, fixed_abs, tag = 'smem constant byte address 0x4 - core index']
  #allocation1 [shape = 'u32[144,128]{1,0:T(1,128)}', space=vmem, size = 0x12000, scoped, tag = 'internal scratch']
  #allocation2 [shape = 'f32[1,1]{1,0:T(1,128)S(1)}', space=vmem, size = 0x200, scoped, tag = 'scoped memory for feature_cnn2_forward.1']
  %s0 = inlined_call_operand.vmem [shape: f32[32,64], index: 0, kind: input, shape index: {}]
  %s1 = inlined_call_operand.vmem [shape: f32[3,64,16], index: 1, kind: input, shape index: {}]
  %s2 = inlined_call_operand.vmem [shape: f32[1,16], index: 2, kind: input, shape index: {}]
  %s3 = inlined_call_operand.vmem [shape: f32[3,16,32], index: 3, kind: input, shape index: {}]
  %s4 = inlined_call_operand.vmem [shape: f32[1,32], index: 4, kind: input, shape index: {}]
  %s5 = inlined_call_operand.vmem [shape: f32[32,24], index: 5, kind: input, shape index: {}]
  %s6 = inlined_call_operand.vmem [shape: f32[1,24], index: 6, kind: input, shape index: {}]
  %s7 = inlined_call_operand.vmem [shape: f32[24,1], index: 7, kind: input, shape index: {}]
  %s8 = inlined_call_operand.<no memory space> [shape: f32[1,1], index: 8, kind: input, shape index: {}]
  %s9 = inlined_call_operand.vmem [shape: f32[6,1], index: 9, kind: output, shape index: {}]
  %s10 = sld [smem:[#allocation0]]
  $region46: #{feature_cnn2_forward.1} parent=0
    _
  %s12 = ssub.s32 1, %s10
  %s13 = scalar_select 0, %s12, %s10
  %v14 = vstv %s8
  %15 = vst [vmem:[#allocation2] sm:$0x1] %v14
  // Predicated region
  $region2: #{feature_cnn2_forward.1} parent=0 // pred_check
    _
  $region3: #{feature_cnn2_forward.1} parent=0 // pred_check_branch
    %17 = sbr.rel (0) target = $region5
  $region4: #{feature_cnn2_forward.1} parent=0 // pred_region
    _
  $region5: #{feature_cnn2_forward.1} parent=0 // pred_fallthru
    _
  // Predicated region
  $region6: #{feature_cnn2_forward.1} parent=0 // pred_check
    _
  $region7: #{feature_cnn2_forward.1} parent=0 // pred_check_branch
    %19 = sbr.rel (0) target = $region9
  $region8: #{feature_cnn2_forward.1} parent=0 // pred_region
    _
  $region9: #{feature_cnn2_forward.1} parent=0 // pred_fallthru
    _
  // Predicated region
  $region10: #{feature_cnn2_forward.1} parent=0 // pred_check
    _
  $region11: #{feature_cnn2_forward.1} parent=0 // pred_check_branch
    %21 = sbr.rel (0) target = $region13
  $region12: #{feature_cnn2_forward.1} parent=0 // pred_region
    _
  $region13: #{feature_cnn2_forward.1} parent=0 // pred_fallthru
    _
  // Predicated region
  $region14: #{feature_cnn2_forward.1} parent=0 // pred_check
    _
  $region15: #{feature_cnn2_forward.1} parent=0 // pred_check_branch
    %23 = sbr.rel (0) target = $region17
  $region16: #{feature_cnn2_forward.1} parent=0 // pred_region
    _
  $region17: #{feature_cnn2_forward.1} parent=0 // pred_fallthru
    _
  // Predicated region
  $region18: #{feature_cnn2_forward.1} parent=0 // pred_check
    _
  $region19: #{feature_cnn2_forward.1} parent=0 // pred_check_branch
    %25 = sbr.rel (0) target = $region21
  $region20: #{feature_cnn2_forward.1} parent=0 // pred_region
    _
  $region21: #{feature_cnn2_forward.1} parent=0 // pred_fallthru
    _
  // Predicated region
  $region22: #{feature_cnn2_forward.1} parent=0 // pred_check
    _
  $region23: #{feature_cnn2_forward.1} parent=0 // pred_check_branch
    %27 = sbr.rel (0) target = $region25
  $region24: #{feature_cnn2_forward.1} parent=0 // pred_region
    _
  $region25: #{feature_cnn2_forward.1} parent=0 // pred_fallthru
    _
  // Predicated region
  $region26: #{feature_cnn2_forward.1} parent=0 // pred_check
    _
  $region27: #{feature_cnn2_forward.1} parent=0 // pred_check_branch
    %29 = sbr.rel (0) target = $region29
  $region28: #{feature_cnn2_forward.1} parent=0 // pred_region
    _
  $region29: #{feature_cnn2_forward.1} parent=0 // pred_fallthru
    _
  // Predicated region
  $region30: #{feature_cnn2_forward.1} parent=0 // pred_check
    _
  $region31: #{feature_cnn2_forward.1} parent=0 // pred_check_branch
    %31 = sbr.rel (0) target = $region33
  $region32: #{feature_cnn2_forward.1} parent=0 // pred_region
    _
  $region33: #{feature_cnn2_forward.1} parent=0 // pred_fallthru
    _
  // Predicated region
  $region34: #{feature_cnn2_forward.1} parent=0 // pred_check
    _
  $region35: #{feature_cnn2_forward.1} parent=0 // pred_check_branch
    %33 = sbr.rel (0) target = $region37
  $region36: #{feature_cnn2_forward.1} parent=0 // pred_region
    _
  $region37: #{feature_cnn2_forward.1} parent=0 // pred_fallthru
    _
  %v34 = vld [vmem:[%s0] sm:$0xff]
  %v35 = vld [vmem:[%s0 + $0x8] sm:$0xff]
  %v36 = vld [vmem:[%s0 + $0x10] sm:$0xff]
  %v37 = vld [vmem:[%s0 + $0x18] sm:$0xff]
  %v38 = vld [vmem:[%s1] sm:$0xff]
  %v39 = vld [vmem:[%s1 + $0x8] sm:$0xff]
  %v40 = vld [vmem:[%s1 + $0x10] sm:$0xff]
  %v41 = vld [vmem:[%s1 + $0x18] sm:$0xff]
  %v42 = vld [vmem:[%s1 + $0x20] sm:$0xff]
  %v43 = vld [vmem:[%s1 + $0x28] sm:$0xff]
  %v44 = vld [vmem:[%s1 + $0x30] sm:$0xff]
  %v45 = vld [vmem:[%s1 + $0x38] sm:$0xff]
  %s46 = scalar_lea.vmem %s1, 64
  %v47 = vld [vmem:[%s46] sm:$0xff]
  %v48 = vld [vmem:[%s46 + $0x8] sm:$0xff]
  %v49 = vld [vmem:[%s46 + $0x10] sm:$0xff]
  %v50 = vld [vmem:[%s46 + $0x18] sm:$0xff]
  %v51 = vld [vmem:[%s46 + $0x20] sm:$0xff]
  %v52 = vld [vmem:[%s46 + $0x28] sm:$0xff]
  %v53 = vld [vmem:[%s46 + $0x30] sm:$0xff]
  %v54 = vld [vmem:[%s46 + $0x38] sm:$0xff]
  %vm55 = vcmask 523264
  %v57 = vsel %vm55, %v34, 0
  %v60 = vsel %vm55, %v35, 0
  %v63 = vsel %vm55, %v36, 0
  %v66 = vsel %vm55, %v37, 0
  %68 = vmatprep.subr.mxu0 0.0
  %69 = vmatpush1.msra.mxu0 0.0
  %70 = vmatprep.subr.mxu0 0.0
  %71 = vmatpush1.msra.mxu0 0.0
  %72 = vmatprep.subr.mxu0 0.0
  %73 = vmatpush1.msra.mxu0 0.0
  %74 = vmatprep.subr.mxu0 0.0
  %75 = vmatpush1.msra.mxu0 0.0
  %76 = vmatprep.subr.mxu0 0.0
  %77 = vmatpush1.msra.mxu0 0.0
  %78 = vmatprep.subr.mxu0 0.0
  %79 = vmatpush1.msra.mxu0 0.0
  %80 = vmatprep.subr.mxu0 0.0
  %81 = vmatpush1.msra.mxu0 0.0
  %82 = vmatprep.subr.mxu0 0.0
  %83 = vmatpush1.msra.mxu0 0.0
  %84 = vmatprep.subr.mxu0 0.0
  %85 = vmatpush1.msra.mxu0 %v54
  %86 = vmatprep.subr.mxu0 0.0
  %87 = vmatpush1.msra.mxu0 %v53
  %88 = vmatprep.subr.mxu0 0.0
  %89 = vmatpush1.msra.mxu0 %v52
  %90 = vmatprep.subr.mxu0 0.0
  %91 = vmatpush1.msra.mxu0 %v51
  %92 = vmatprep.subr.mxu0 0.0
  %93 = vmatpush1.msra.mxu0 %v50
  %94 = vmatprep.subr.mxu0 0.0
  %95 = vmatpush1.msra.mxu0 %v49
  %96 = vmatprep.subr.mxu0 0.0
  %97 = vmatpush1.msra.mxu0 %v48
  %98 = vmatprep.subr.mxu0 0.0
  %99 = vmatpush1.msra.mxu0 %v47
  %100 = vmatprep.subr.mxu0 0.0
  %101 = vmatpush2.msra.mxu0 0.0
  %102 = vmatprep.subr.mxu0 0.0
  %103 = vmatpush2.msra.mxu0 0.0
  %104 = vmatprep.subr.mxu0 0.0
  %105 = vmatpush2.msra.mxu0 0.0
  %106 = vmatprep.subr.mxu0 0.0
  %107 = vmatpush2.msra.mxu0 0.0
  %108 = vmatprep.subr.mxu0 0.0
  %109 = vmatpush2.msra.mxu0 0.0
  %110 = vmatprep.subr.mxu0 0.0
  %111 = vmatpush2.msra.mxu0 0.0
  %112 = vmatprep.subr.mxu0 0.0
  %113 = vmatpush2.msra.mxu0 0.0
  %114 = vmatprep.subr.mxu0 0.0
  %115 = vmatpush2.msra.mxu0 0.0
  %116 = vmatprep.subr.mxu0 0.0
  %117 = vmatpush2.msra.mxu0 0.0
  %118 = vmatprep.subr.mxu0 0.0
  %119 = vmatpush2.msra.mxu0 0.0
  %120 = vmatprep.subr.mxu0 0.0
  %121 = vmatpush2.msra.mxu0 0.0
  %122 = vmatprep.subr.mxu0 0.0
  %123 = vmatpush2.msra.mxu0 0.0
  %124 = vmatprep.subr.mxu0 0.0
  %125 = vmatpush2.msra.mxu0 0.0
  %126 = vmatprep.subr.mxu0 0.0
  %127 = vmatpush2.msra.mxu0 0.0
  %128 = vmatprep.subr.mxu0 0.0
  %129 = vmatpush2.msra.mxu0 0.0
  %130 = vmatprep.subr.mxu0 0.0
  %131 = vmatpush2.msra.mxu0 0.0
  %132 = vmatprep.mubr.f32.mxu0 0.0
  %133 = vmatmul.mubr.f32.gmra.mxu0 %v57
  %v134 = vpop.f32.mrf.mxu0
  %v135 = vadd.f32 0.0, %v134
  %v136 = vpop.f32.mrf.mxu0
  %137 = vmatprep.mubr.f32.mxu0 0.0
  %138 = vmatmul.mubr.f32.gmra.mxu0 %v60
  %v139 = vpop.f32.mrf.mxu0
  %v140 = vadd.f32 0.0, %v139
  %v141 = vpop.f32.mrf.mxu0
  %142 = vmatprep.mubr.f32.mxu0 0.0
  %143 = vmatmul.mubr.f32.gmra.mxu0 %v63
  %v144 = vpop.f32.mrf.mxu0
  %v145 = vadd.f32 0.0, %v144
  %v146 = vpop.f32.mrf.mxu0
  %147 = vmatprep.mubr.f32.mxu0 0.0
  %148 = vmatmul.mubr.f32.gmra.mxu0 %v66
  %v149 = vpop.f32.mrf.mxu0
  %v150 = vadd.f32 0.0, %v149
  %v151 = vpop.f32.mrf.mxu0
  %152 = vdwg.mxu0
  %v153 = vrot.slane %v135, 1
  %v154 = vrot.slane %v140, 1
  %v155 = vrot.slane %v145, 1
  %v156 = vrot.slane %v150, 1
  %v157 = vlaneseq
  %v158 = vshrl.u32 %v157, 7
  %vm159 = vcmp.lt.s32.totalorder %v158, 7
  %v160 = vsel %vm159, %v155, %v156
  %v161 = vsel %vm159, %v154, %v155
  %v162 = vsel %vm159, %v153, %v154
  %v163 = vsel %vm159, %v156, %v153
  %164 = vmatprep.subr.mxu0 0.0
  %165 = vmatpush1.msra.mxu0 0.0
  %166 = vmatprep.subr.mxu0 0.0
  %167 = vmatpush1.msra.mxu0 0.0
  %168 = vmatprep.subr.mxu0 0.0
  %169 = vmatpush1.msra.mxu0 0.0
  %170 = vmatprep.subr.mxu0 0.0
  %171 = vmatpush1.msra.mxu0 0.0
  %172 = vmatprep.subr.mxu0 0.0
  %173 = vmatpush1.msra.mxu0 0.0
  %174 = vmatprep.subr.mxu0 0.0
  %175 = vmatpush1.msra.mxu0 0.0
  %176 = vmatprep.subr.mxu0 0.0
  %177 = vmatpush1.msra.mxu0 0.0
  %178 = vmatprep.subr.mxu0 0.0
  %179 = vmatpush1.msra.mxu0 0.0
  %180 = vmatprep.subr.mxu0 0.0
  %181 = vmatpush1.msra.mxu0 %v45
  %182 = vmatprep.subr.mxu0 0.0
  %183 = vmatpush1.msra.mxu0 %v44
  %184 = vmatprep.subr.mxu0 0.0
  %185 = vmatpush1.msra.mxu0 %v43
  %186 = vmatprep.subr.mxu0 0.0
  %187 = vmatpush1.msra.mxu0 %v42
  %188 = vmatprep.subr.mxu0 0.0
  %189 = vmatpush1.msra.mxu0 %v41
  %190 = vmatprep.subr.mxu0 0.0
  %191 = vmatpush1.msra.mxu0 %v40
  %192 = vmatprep.subr.mxu0 0.0
  %193 = vmatpush1.msra.mxu0 %v39
  %194 = vmatprep.subr.mxu0 0.0
  %195 = vmatpush1.msra.mxu0 %v38
  %196 = vmatprep.subr.mxu0 0.0
  %197 = vmatpush2.msra.mxu0 0.0
  %198 = vmatprep.subr.mxu0 0.0
  %199 = vmatpush2.msra.mxu0 0.0
  %200 = vmatprep.subr.mxu0 0.0
  %201 = vmatpush2.msra.mxu0 0.0
  %202 = vmatprep.subr.mxu0 0.0
  %203 = vmatpush2.msra.mxu0 0.0
  %204 = vmatprep.subr.mxu0 0.0
  %205 = vmatpush2.msra.mxu0 0.0
  %206 = vmatprep.subr.mxu0 0.0
  %207 = vmatpush2.msra.mxu0 0.0
  %208 = vmatprep.subr.mxu0 0.0
  %209 = vmatpush2.msra.mxu0 0.0
  %210 = vmatprep.subr.mxu0 0.0
  %211 = vmatpush2.msra.mxu0 0.0
  %212 = vmatprep.subr.mxu0 0.0
  %213 = vmatpush2.msra.mxu0 0.0
  %214 = vmatprep.subr.mxu0 0.0
  %215 = vmatpush2.msra.mxu0 0.0
  %216 = vmatprep.subr.mxu0 0.0
  %217 = vmatpush2.msra.mxu0 0.0
  %218 = vmatprep.subr.mxu0 0.0
  %219 = vmatpush2.msra.mxu0 0.0
  %220 = vmatprep.subr.mxu0 0.0
  %221 = vmatpush2.msra.mxu0 0.0
  %222 = vmatprep.subr.mxu0 0.0
  %223 = vmatpush2.msra.mxu0 0.0
  %224 = vmatprep.subr.mxu0 0.0
  %225 = vmatpush2.msra.mxu0 0.0
  %226 = vmatprep.subr.mxu0 0.0
  %227 = vmatpush2.msra.mxu0 0.0
  %228 = vmatprep.mubr.f32.mxu0 0.0
  %229 = vmatmul.mubr.f32.gmra.mxu0 %v57
  %v230 = vpop.f32.mrf.mxu0
  %v231 = vadd.f32 %v162, %v230
  %v232 = vpop.f32.mrf.mxu0
  %233 = vmatprep.mubr.f32.mxu0 0.0
  %234 = vmatmul.mubr.f32.gmra.mxu0 %v60
  %v235 = vpop.f32.mrf.mxu0
  %v236 = vadd.f32 %v161, %v235
  %v237 = vpop.f32.mrf.mxu0
  %238 = vmatprep.mubr.f32.mxu0 0.0
  %239 = vmatmul.mubr.f32.gmra.mxu0 %v63
  %v240 = vpop.f32.mrf.mxu0
  %v241 = vadd.f32 %v160, %v240
  %v242 = vpop.f32.mrf.mxu0
  %243 = vmatprep.mubr.f32.mxu0 0.0
  %244 = vmatmul.mubr.f32.gmra.mxu0 %v66
  %v245 = vpop.f32.mrf.mxu0
  %v246 = vadd.f32 %v163, %v245
  %v247 = vpop.f32.mrf.mxu0
  %248 = vdwg.mxu0
  %s249 = scalar_lea.vmem %s1, 128
  %v250 = vld [vmem:[%s249] sm:$0xff]
  %v251 = vld [vmem:[%s249 + $0x8] sm:$0xff]
  %v252 = vld [vmem:[%s249 + $0x10] sm:$0xff]
  %v253 = vld [vmem:[%s249 + $0x18] sm:$0xff]
  %v254 = vld [vmem:[%s249 + $0x20] sm:$0xff]
  %v255 = vld [vmem:[%s249 + $0x28] sm:$0xff]
  %v256 = vld [vmem:[%s249 + $0x30] sm:$0xff]
  %v257 = vld [vmem:[%s249 + $0x38] sm:$0xff]
  %258 = vmatprep.subr.mxu0 0.0
  %259 = vmatpush1.msra.mxu0 0.0
  %260 = vmatprep.subr.mxu0 0.0
  %261 = vmatpush1.msra.mxu0 0.0
  %262 = vmatprep.subr.mxu0 0.0
  %263 = vmatpush1.msra.mxu0 0.0
  %264 = vmatprep.subr.mxu0 0.0
  %265 = vmatpush1.msra.mxu0 0.0
  %266 = vmatprep.subr.mxu0 0.0
  %267 = vmatpush1.msra.mxu0 0.0
  %268 = vmatprep.subr.mxu0 0.0
  %269 = vmatpush1.msra.mxu0 0.0
  %270 = vmatprep.subr.mxu0 0.0
  %271 = vmatpush1.msra.mxu0 0.0
  %272 = vmatprep.subr.mxu0 0.0
  %273 = vmatpush1.msra.mxu0 0.0
  %274 = vmatprep.subr.mxu0 0.0
  %275 = vmatpush1.msra.mxu0 %v257
  %276 = vmatprep.subr.mxu0 0.0
  %277 = vmatpush1.msra.mxu0 %v256
  %278 = vmatprep.subr.mxu0 0.0
  %279 = vmatpush1.msra.mxu0 %v255
  %280 = vmatprep.subr.mxu0 0.0
  %281 = vmatpush1.msra.mxu0 %v254
  %282 = vmatprep.subr.mxu0 0.0
  %283 = vmatpush1.msra.mxu0 %v253
  %284 = vmatprep.subr.mxu0 0.0
  %285 = vmatpush1.msra.mxu0 %v252
  %286 = vmatprep.subr.mxu0 0.0
  %287 = vmatpush1.msra.mxu0 %v251
  %288 = vmatprep.subr.mxu0 0.0
  %289 = vmatpush1.msra.mxu0 %v250
  %290 = vmatprep.subr.mxu0 0.0
  %291 = vmatpush2.msra.mxu0 0.0
  %292 = vmatprep.subr.mxu0 0.0
  %293 = vmatpush2.msra.mxu0 0.0
  %294 = vmatprep.subr.mxu0 0.0
  %295 = vmatpush2.msra.mxu0 0.0
  %296 = vmatprep.subr.mxu0 0.0
  %297 = vmatpush2.msra.mxu0 0.0
  %298 = vmatprep.subr.mxu0 0.0
  %299 = vmatpush2.msra.mxu0 0.0
  %300 = vmatprep.subr.mxu0 0.0
  %301 = vmatpush2.msra.mxu0 0.0
  %302 = vmatprep.subr.mxu0 0.0
  %303 = vmatpush2.msra.mxu0 0.0
  %304 = vmatprep.subr.mxu0 0.0
  %305 = vmatpush2.msra.mxu0 0.0
  %306 = vmatprep.subr.mxu0 0.0
  %307 = vmatpush2.msra.mxu0 0.0
  %308 = vmatprep.subr.mxu0 0.0
  %309 = vmatpush2.msra.mxu0 0.0
  %310 = vmatprep.subr.mxu0 0.0
  %311 = vmatpush2.msra.mxu0 0.0
  %312 = vmatprep.subr.mxu0 0.0
  %313 = vmatpush2.msra.mxu0 0.0
  %314 = vmatprep.subr.mxu0 0.0
  %315 = vmatpush2.msra.mxu0 0.0
  %316 = vmatprep.subr.mxu0 0.0
  %317 = vmatpush2.msra.mxu0 0.0
  %318 = vmatprep.subr.mxu0 0.0
  %319 = vmatpush2.msra.mxu0 0.0
  %320 = vmatprep.subr.mxu0 0.0
  %321 = vmatpush2.msra.mxu0 0.0
  %322 = vmatprep.mubr.f32.mxu0 0.0
  %323 = vmatmul.mubr.f32.gmra.mxu0 %v57
  %v324 = vpop.f32.mrf.mxu0
  %v325 = vadd.f32 0.0, %v324
  %v326 = vpop.f32.mrf.mxu0
  %327 = vmatprep.mubr.f32.mxu0 0.0
  %328 = vmatmul.mubr.f32.gmra.mxu0 %v60
  %v329 = vpop.f32.mrf.mxu0
  %v330 = vadd.f32 0.0, %v329
  %v331 = vpop.f32.mrf.mxu0
  %332 = vmatprep.mubr.f32.mxu0 0.0
  %333 = vmatmul.mubr.f32.gmra.mxu0 %v63
  %v334 = vpop.f32.mrf.mxu0
  %v335 = vadd.f32 0.0, %v334
  %v336 = vpop.f32.mrf.mxu0
  %337 = vmatprep.mubr.f32.mxu0 0.0
  %338 = vmatmul.mubr.f32.gmra.mxu0 %v66
  %v339 = vpop.f32.mrf.mxu0
  %v340 = vadd.f32 0.0, %v339
  %v341 = vpop.f32.mrf.mxu0
  %342 = vdwg.mxu0
  %v343 = vrot.slane %v325, 2
  %v344 = vrot.slane %v330, 2
  %v345 = vrot.slane %v335, 2
  %v346 = vrot.slane %v340, 2
  %vm347 = vcmp.lt.s32.totalorder %v158, 6
  %v348 = vsel %vm347, %v345, %v346
  %v349 = vsel %vm347, %v344, %v345
  %v350 = vsel %vm347, %v343, %v344
  %v351 = vsel %vm347, %v346, %v343
  %v352 = vadd.f32 %v231, %v350
  %v353 = vadd.f32 %v236, %v349
  %v354 = vadd.f32 %v241, %v348
  %v355 = vadd.f32 %v246, %v351
  %v356 = vld [vmem:[%s2] sm:$0x1]
  %v358 = vlaneseq
  %v359 = vshrl.u32 %v358, 7
  %v360 = vsub.s32 0, %v359
  %v361 = vrot.slane %v356, %v360
  %v363 = vadd.f32 %v352, %v361
  %v364 = vadd.f32 %v353, %v361
  %v365 = vadd.f32 %v354, %v361
  %v366 = vadd.f32 %v355, %v361
  %v367 = vmax.f32 %v363, 0.0
  %v368 = vmax.f32 %v364, 0.0
  %v369 = vmax.f32 %v365, 0.0
  %v370 = vmax.f32 %v366, 0.0
  %v371 = vld [vmem:[%s3] sm:$0xff]
  %v372 = vld [vmem:[%s3 + $0x8] sm:$0xff]
  %s373 = scalar_lea.vmem %s3, 16
  %v374 = vld [vmem:[%s373] sm:$0xff]
  %v375 = vld [vmem:[%s373 + $0x8] sm:$0xff]
  %vm376 = vcmask 130048
  %v378 = vsel %vm376, %v367, 0
  %v381 = vsel %vm376, %v368, 0
  %v384 = vsel %vm376, %v369, 0
  %v387 = vsel %vm376, %v370, 0
  %389 = vmatprep.subr.mxu0 0.0
  %390 = vmatpush1.msra.mxu0 0.0
  %391 = vmatprep.subr.mxu0 0.0
  %392 = vmatpush1.msra.mxu0 0.0
  %393 = vmatprep.subr.mxu0 0.0
  %394 = vmatpush1.msra.mxu0 0.0
  %395 = vmatprep.subr.mxu0 0.0
  %396 = vmatpush1.msra.mxu0 0.0
  %397 = vmatprep.subr.mxu0 0.0
  %398 = vmatpush1.msra.mxu0 0.0
  %399 = vmatprep.subr.mxu0 0.0
  %400 = vmatpush1.msra.mxu0 0.0
  %401 = vmatprep.subr.mxu0 0.0
  %402 = vmatpush1.msra.mxu0 0.0
  %403 = vmatprep.subr.mxu0 0.0
  %404 = vmatpush1.msra.mxu0 0.0
  %405 = vmatprep.subr.mxu0 0.0
  %406 = vmatpush1.msra.mxu0 0.0
  %407 = vmatprep.subr.mxu0 0.0
  %408 = vmatpush1.msra.mxu0 0.0
  %409 = vmatprep.subr.mxu0 0.0
  %410 = vmatpush1.msra.mxu0 0.0
  %411 = vmatprep.subr.mxu0 0.0
  %412 = vmatpush1.msra.mxu0 0.0
  %413 = vmatprep.subr.mxu0 0.0
  %414 = vmatpush1.msra.mxu0 0.0
  %415 = vmatprep.subr.mxu0 0.0
  %416 = vmatpush1.msra.mxu0 0.0
  %417 = vmatprep.subr.mxu0 0.0
  %418 = vmatpush1.msra.mxu0 %v375
  %419 = vmatprep.subr.mxu0 0.0
  %420 = vmatpush1.msra.mxu0 %v374
  %421 = vmatprep.subr.mxu0 0.0
  %422 = vmatpush2.msra.mxu0 0.0
  %423 = vmatprep.subr.mxu0 0.0
  %424 = vmatpush2.msra.mxu0 0.0
  %425 = vmatprep.subr.mxu0 0.0
  %426 = vmatpush2.msra.mxu0 0.0
  %427 = vmatprep.subr.mxu0 0.0
  %428 = vmatpush2.msra.mxu0 0.0
  %429 = vmatprep.subr.mxu0 0.0
  %430 = vmatpush2.msra.mxu0 0.0
  %431 = vmatprep.subr.mxu0 0.0
  %432 = vmatpush2.msra.mxu0 0.0
  %433 = vmatprep.subr.mxu0 0.0
  %434 = vmatpush2.msra.mxu0 0.0
  %435 = vmatprep.subr.mxu0 0.0
  %436 = vmatpush2.msra.mxu0 0.0
  %437 = vmatprep.subr.mxu0 0.0
  %438 = vmatpush2.msra.mxu0 0.0
  %439 = vmatprep.subr.mxu0 0.0
  %440 = vmatpush2.msra.mxu0 0.0
  %441 = vmatprep.subr.mxu0 0.0
  %442 = vmatpush2.msra.mxu0 0.0
  %443 = vmatprep.subr.mxu0 0.0
  %444 = vmatpush2.msra.mxu0 0.0
  %445 = vmatprep.subr.mxu0 0.0
  %446 = vmatpush2.msra.mxu0 0.0
  %447 = vmatprep.subr.mxu0 0.0
  %448 = vmatpush2.msra.mxu0 0.0
  %449 = vmatprep.subr.mxu0 0.0
  %450 = vmatpush2.msra.mxu0 0.0
  %451 = vmatprep.subr.mxu0 0.0
  %452 = vmatpush2.msra.mxu0 0.0
  %453 = vmatprep.mubr.f32.mxu0 0.0
  %454 = vmatmul.mubr.f32.gmra.mxu0 %v378
  %v455 = vpop.f32.mrf.mxu0
  %v456 = vadd.f32 0.0, %v455
  %v457 = vpop.f32.mrf.mxu0
  %458 = vmatprep.mubr.f32.mxu0 0.0
  %459 = vmatmul.mubr.f32.gmra.mxu0 %v381
  %v460 = vpop.f32.mrf.mxu0
  %v461 = vadd.f32 0.0, %v460
  %v462 = vpop.f32.mrf.mxu0
  %463 = vmatprep.mubr.f32.mxu0 0.0
  %464 = vmatmul.mubr.f32.gmra.mxu0 %v384
  %v465 = vpop.f32.mrf.mxu0
  %v466 = vadd.f32 0.0, %v465
  %v467 = vpop.f32.mrf.mxu0
  %468 = vmatprep.mubr.f32.mxu0 0.0
  %469 = vmatmul.mubr.f32.gmra.mxu0 %v387
  %v470 = vpop.f32.mrf.mxu0
  %v471 = vadd.f32 0.0, %v470
  %v472 = vpop.f32.mrf.mxu0
  %473 = vdwg.mxu0
  %v474 = vrot.slane %v456, 1
  %v475 = vrot.slane %v461, 1
  %v476 = vrot.slane %v466, 1
  %v477 = vrot.slane %v471, 1
  %v478 = vsel %vm159, %v476, %v477
  %v479 = vsel %vm159, %v475, %v476
  %v480 = vsel %vm159, %v474, %v475
  %v481 = vsel %vm159, %v477, %v474
  %482 = vmatprep.subr.mxu0 0.0
  %483 = vmatpush1.msra.mxu0 0.0
  %484 = vmatprep.subr.mxu0 0.0
  %485 = vmatpush1.msra.mxu0 0.0
  %486 = vmatprep.subr.mxu0 0.0
  %487 = vmatpush1.msra.mxu0 0.0
  %488 = vmatprep.subr.mxu0 0.0
  %489 = vmatpush1.msra.mxu0 0.0
  %490 = vmatprep.subr.mxu0 0.0
  %491 = vmatpush1.msra.mxu0 0.0
  %492 = vmatprep.subr.mxu0 0.0
  %493 = vmatpush1.msra.mxu0 0.0
  %494 = vmatprep.subr.mxu0 0.0
  %495 = vmatpush1.msra.mxu0 0.0
  %496 = vmatprep.subr.mxu0 0.0
  %497 = vmatpush1.msra.mxu0 0.0
  %498 = vmatprep.subr.mxu0 0.0
  %499 = vmatpush1.msra.mxu0 0.0
  %500 = vmatprep.subr.mxu0 0.0
  %501 = vmatpush1.msra.mxu0 0.0
  %502 = vmatprep.subr.mxu0 0.0
  %503 = vmatpush1.msra.mxu0 0.0
  %504 = vmatprep.subr.mxu0 0.0
  %505 = vmatpush1.msra.mxu0 0.0
  %506 = vmatprep.subr.mxu0 0.0
  %507 = vmatpush1.msra.mxu0 0.0
  %508 = vmatprep.subr.mxu0 0.0
  %509 = vmatpush1.msra.mxu0 0.0
  %510 = vmatprep.subr.mxu0 0.0
  %511 = vmatpush1.msra.mxu0 %v372
  %512 = vmatprep.subr.mxu0 0.0
  %513 = vmatpush1.msra.mxu0 %v371
  %514 = vmatprep.subr.mxu0 0.0
  %515 = vmatpush2.msra.mxu0 0.0
  %516 = vmatprep.subr.mxu0 0.0
  %517 = vmatpush2.msra.mxu0 0.0
  %518 = vmatprep.subr.mxu0 0.0
  %519 = vmatpush2.msra.mxu0 0.0
  %520 = vmatprep.subr.mxu0 0.0
  %521 = vmatpush2.msra.mxu0 0.0
  %522 = vmatprep.subr.mxu0 0.0
  %523 = vmatpush2.msra.mxu0 0.0
  %524 = vmatprep.subr.mxu0 0.0
  %525 = vmatpush2.msra.mxu0 0.0
  %526 = vmatprep.subr.mxu0 0.0
  %527 = vmatpush2.msra.mxu0 0.0
  %528 = vmatprep.subr.mxu0 0.0
  %529 = vmatpush2.msra.mxu0 0.0
  %530 = vmatprep.subr.mxu0 0.0
  %531 = vmatpush2.msra.mxu0 0.0
  %532 = vmatprep.subr.mxu0 0.0
  %533 = vmatpush2.msra.mxu0 0.0
  %534 = vmatprep.subr.mxu0 0.0
  %535 = vmatpush2.msra.mxu0 0.0
  %536 = vmatprep.subr.mxu0 0.0
  %537 = vmatpush2.msra.mxu0 0.0
  %538 = vmatprep.subr.mxu0 0.0
  %539 = vmatpush2.msra.mxu0 0.0
  %540 = vmatprep.subr.mxu0 0.0
  %541 = vmatpush2.msra.mxu0 0.0
  %542 = vmatprep.subr.mxu0 0.0
  %543 = vmatpush2.msra.mxu0 0.0
  %544 = vmatprep.subr.mxu0 0.0
  %545 = vmatpush2.msra.mxu0 0.0
  %546 = vmatprep.mubr.f32.mxu0 0.0
  %547 = vmatmul.mubr.f32.gmra.mxu0 %v378
  %v548 = vpop.f32.mrf.mxu0
  %v549 = vadd.f32 %v480, %v548
  %v550 = vpop.f32.mrf.mxu0
  %551 = vmatprep.mubr.f32.mxu0 0.0
  %552 = vmatmul.mubr.f32.gmra.mxu0 %v381
  %v553 = vpop.f32.mrf.mxu0
  %v554 = vadd.f32 %v479, %v553
  %v555 = vpop.f32.mrf.mxu0
  %556 = vmatprep.mubr.f32.mxu0 0.0
  %557 = vmatmul.mubr.f32.gmra.mxu0 %v384
  %v558 = vpop.f32.mrf.mxu0
  %v559 = vadd.f32 %v478, %v558
  %v560 = vpop.f32.mrf.mxu0
  %561 = vmatprep.mubr.f32.mxu0 0.0
  %562 = vmatmul.mubr.f32.gmra.mxu0 %v387
  %v563 = vpop.f32.mrf.mxu0
  %v564 = vadd.f32 %v481, %v563
  %v565 = vpop.f32.mrf.mxu0
  %566 = vdwg.mxu0
  %s567 = scalar_lea.vmem %s3, 32
  %v568 = vld [vmem:[%s567] sm:$0xff]
  %v569 = vld [vmem:[%s567 + $0x8] sm:$0xff]
  %570 = vmatprep.subr.mxu0 0.0
  %571 = vmatpush1.msra.mxu0 0.0
  %572 = vmatprep.subr.mxu0 0.0
  %573 = vmatpush1.msra.mxu0 0.0
  %574 = vmatprep.subr.mxu0 0.0
  %575 = vmatpush1.msra.mxu0 0.0
  %576 = vmatprep.subr.mxu0 0.0
  %577 = vmatpush1.msra.mxu0 0.0
  %578 = vmatprep.subr.mxu0 0.0
  %579 = vmatpush1.msra.mxu0 0.0
  %580 = vmatprep.subr.mxu0 0.0
  %581 = vmatpush1.msra.mxu0 0.0
  %582 = vmatprep.subr.mxu0 0.0
  %583 = vmatpush1.msra.mxu0 0.0
  %584 = vmatprep.subr.mxu0 0.0
  %585 = vmatpush1.msra.mxu0 0.0
  %586 = vmatprep.subr.mxu0 0.0
  %587 = vmatpush1.msra.mxu0 0.0
  %588 = vmatprep.subr.mxu0 0.0
  %589 = vmatpush1.msra.mxu0 0.0
  %590 = vmatprep.subr.mxu0 0.0
  %591 = vmatpush1.msra.mxu0 0.0
  %592 = vmatprep.subr.mxu0 0.0
  %593 = vmatpush1.msra.mxu0 0.0
  %594 = vmatprep.subr.mxu0 0.0
  %595 = vmatpush1.msra.mxu0 0.0
  %596 = vmatprep.subr.mxu0 0.0
  %597 = vmatpush1.msra.mxu0 0.0
  %598 = vmatprep.subr.mxu0 0.0
  %599 = vmatpush1.msra.mxu0 %v569
  %600 = vmatprep.subr.mxu0 0.0
  %601 = vmatpush1.msra.mxu0 %v568
  %602 = vmatprep.subr.mxu0 0.0
  %603 = vmatpush2.msra.mxu0 0.0
  %604 = vmatprep.subr.mxu0 0.0
  %605 = vmatpush2.msra.mxu0 0.0
  %606 = vmatprep.subr.mxu0 0.0
  %607 = vmatpush2.msra.mxu0 0.0
  %608 = vmatprep.subr.mxu0 0.0
  %609 = vmatpush2.msra.mxu0 0.0
  %610 = vmatprep.subr.mxu0 0.0
  %611 = vmatpush2.msra.mxu0 0.0
  %612 = vmatprep.subr.mxu0 0.0
  %613 = vmatpush2.msra.mxu0 0.0
  %614 = vmatprep.subr.mxu0 0.0
  %615 = vmatpush2.msra.mxu0 0.0
  %616 = vmatprep.subr.mxu0 0.0
  %617 = vmatpush2.msra.mxu0 0.0
  %618 = vmatprep.subr.mxu0 0.0
  %619 = vmatpush2.msra.mxu0 0.0
  %620 = vmatprep.subr.mxu0 0.0
  %621 = vmatpush2.msra.mxu0 0.0
  %622 = vmatprep.subr.mxu0 0.0
  %623 = vmatpush2.msra.mxu0 0.0
  %624 = vmatprep.subr.mxu0 0.0
  %625 = vmatpush2.msra.mxu0 0.0
  %626 = vmatprep.subr.mxu0 0.0
  %627 = vmatpush2.msra.mxu0 0.0
  %628 = vmatprep.subr.mxu0 0.0
  %629 = vmatpush2.msra.mxu0 0.0
  %630 = vmatprep.subr.mxu0 0.0
  %631 = vmatpush2.msra.mxu0 0.0
  %632 = vmatprep.subr.mxu0 0.0
  %633 = vmatpush2.msra.mxu0 0.0
  %634 = vmatprep.mubr.f32.mxu0 0.0
  %635 = vmatmul.mubr.f32.gmra.mxu0 %v378
  %v636 = vpop.f32.mrf.mxu0
  %v637 = vadd.f32 0.0, %v636
  %v638 = vpop.f32.mrf.mxu0
  %639 = vmatprep.mubr.f32.mxu0 0.0
  %640 = vmatmul.mubr.f32.gmra.mxu0 %v381
  %v641 = vpop.f32.mrf.mxu0
  %v642 = vadd.f32 0.0, %v641
  %v643 = vpop.f32.mrf.mxu0
  %644 = vmatprep.mubr.f32.mxu0 0.0
  %645 = vmatmul.mubr.f32.gmra.mxu0 %v384
  %v646 = vpop.f32.mrf.mxu0
  %v647 = vadd.f32 0.0, %v646
  %v648 = vpop.f32.mrf.mxu0
  %649 = vmatprep.mubr.f32.mxu0 0.0
  %650 = vmatmul.mubr.f32.gmra.mxu0 %v387
  %v651 = vpop.f32.mrf.mxu0
  %v652 = vadd.f32 0.0, %v651
  %v653 = vpop.f32.mrf.mxu0
  %654 = vdwg.mxu0
  %v655 = vrot.slane %v637, 2
  %v656 = vrot.slane %v642, 2
  %v657 = vrot.slane %v647, 2
  %v658 = vrot.slane %v652, 2
  %v659 = vsel %vm347, %v657, %v658
  %v660 = vsel %vm347, %v656, %v657
  %v661 = vsel %vm347, %v655, %v656
  %v662 = vsel %vm347, %v658, %v655
  %v663 = vadd.f32 %v549, %v661
  %v664 = vadd.f32 %v554, %v660
  %v665 = vadd.f32 %v559, %v659
  %v666 = vadd.f32 %v564, %v662
  %v667 = vld [vmem:[%s4] sm:$0x1]
  %v669 = vlaneseq
  %v670 = vshrl.u32 %v669, 7
  %v671 = vsub.s32 0, %v670
  %v672 = vrot.slane %v667, %v671
  %v674 = vadd.f32 %v663, %v672
  %v675 = vadd.f32 %v664, %v672
  %v676 = vadd.f32 %v665, %v672
  %v677 = vadd.f32 %v666, %v672
  %v678 = vmax.f32 %v674, 0.0
  %v679 = vmax.f32 %v675, 0.0
  %v680 = vmax.f32 %v676, 0.0
  %v681 = vmax.f32 %v677, 0.0
  %vm682 = vcmask 257024
  %v683 = vsel %vm682, %v678, -inf
  %v684 = vrot.slane %v683, 4
  %v685 = vmax.f32 %v683, %v684
  %v686 = vrot.slane %v685, 2
  %v687 = vmax.f32 %v685, %v686
  %v688 = vrot.slane %v687, 1
  %v689 = vmax.f32 %v687, %v688
  %v690 = vsel %vm682, %v680, -inf
  %v691 = vrot.slane %v690, 4
  %v692 = vmax.f32 %v690, %v691
  %v693 = vrot.slane %v692, 2
  %v694 = vmax.f32 %v692, %v693
  %v695 = vrot.slane %v694, 1
  %v696 = vmax.f32 %v694, %v695
  %vm697 = vcmask 261124
  %v698 = vsel %vm697, %v678, -inf
  %vm699 = vcmask 253952
  %v700 = vsel %vm699, %v679, -inf
  %v701 = vmax.f32 %v698, %v700
  %v702 = vrot.slane %v701, 4
  %v703 = vmax.f32 %v701, %v702
  %v704 = vrot.slane %v703, 2
  %v705 = vmax.f32 %v703, %v704
  %v706 = vrot.slane %v705, 1
  %v707 = vmax.f32 %v705, %v706
  %v708 = vsel %vm697, %v680, -inf
  %v709 = vsel %vm699, %v681, -inf
  %v710 = vmax.f32 %v708, %v709
  %v711 = vrot.slane %v710, 4
  %v712 = vmax.f32 %v710, %v711
  %v713 = vrot.slane %v712, 2
  %v714 = vmax.f32 %v712, %v713
  %v715 = vrot.slane %v714, 1
  %v716 = vmax.f32 %v714, %v715
  %vm717 = vcmask 257025
  %v718 = vsel %vm717, %v679, -inf
  %v719 = vrot.slane %v718, 4
  %v720 = vmax.f32 %v718, %v719
  %v721 = vrot.slane %v720, 2
  %v722 = vmax.f32 %v720, %v721
  %v723 = vrot.slane %v722, 1
  %v724 = vmax.f32 %v722, %v723
  %v725 = vsel %vm717, %v681, -inf
  %v726 = vrot.slane %v725, 4
  %v727 = vmax.f32 %v725, %v726
  %v728 = vrot.slane %v727, 2
  %v729 = vmax.f32 %v727, %v728
  %v730 = vrot.slane %v729, 1
  %v731 = vmax.f32 %v729, %v730
  %vm734 = vcmask 1041409
  %v735 = vsel %vm734, %v696, %v689
  %vm739 = vcmask 1043459
  %v740 = vsel %vm739, %v716, %v707
  %vm744 = vcmask 1045509
  %v745 = vsel %vm744, %v731, %v724
  %vm747 = vcmask 1041408
  %v748 = vsel %vm747, %v735, %v740
  %vm749 = vcmask 1043456
  %v750 = vsel %vm749, %v748, %v745
  %v751 = vld [vmem:[%s5] sm:$0xff]
  %v752 = vld [vmem:[%s5 + $0x8] sm:$0xff]
  %v753 = vld [vmem:[%s5 + $0x10] sm:$0xff]
  %v754 = vld [vmem:[%s5 + $0x18] sm:$0xff]
  %v755 = vld [vmem:[%s6] sm:$0x1]
  %v757 = vlaneseq
  %v758 = vshrl.u32 %v757, 7
  %v759 = vsub.s32 0, %v758
  %v760 = vrot.slane %v755, %v759
  %vm762 = vcmask 261120
  %v764 = vsel %vm762, %v750, 0
  %766 = vmatprep.subr.mxu0 0.0
  %767 = vmatpush1.msra.mxu0 0.0
  %768 = vmatprep.subr.mxu0 0.0
  %769 = vmatpush1.msra.mxu0 0.0
  %770 = vmatprep.subr.mxu0 0.0
  %771 = vmatpush1.msra.mxu0 0.0
  %772 = vmatprep.subr.mxu0 0.0
  %773 = vmatpush1.msra.mxu0 0.0
  %774 = vmatprep.subr.mxu0 0.0
  %775 = vmatpush1.msra.mxu0 0.0
  %776 = vmatprep.subr.mxu0 0.0
  %777 = vmatpush1.msra.mxu0 0.0
  %778 = vmatprep.subr.mxu0 0.0
  %779 = vmatpush1.msra.mxu0 0.0
  %780 = vmatprep.subr.mxu0 0.0
  %781 = vmatpush1.msra.mxu0 0.0
  %782 = vmatprep.subr.mxu0 0.0
  %783 = vmatpush1.msra.mxu0 0.0
  %784 = vmatprep.subr.mxu0 0.0
  %785 = vmatpush1.msra.mxu0 0.0
  %786 = vmatprep.subr.mxu0 0.0
  %787 = vmatpush1.msra.mxu0 0.0
  %788 = vmatprep.subr.mxu0 0.0
  %789 = vmatpush1.msra.mxu0 0.0
  %790 = vmatprep.subr.mxu0 0.0
  %791 = vmatpush1.msra.mxu0 %v754
  %792 = vmatprep.subr.mxu0 0.0
  %793 = vmatpush1.msra.mxu0 %v753
  %794 = vmatprep.subr.mxu0 0.0
  %795 = vmatpush1.msra.mxu0 %v752
  %796 = vmatprep.subr.mxu0 0.0
  %797 = vmatpush1.msra.mxu0 %v751
  %798 = vmatprep.subr.mxu0 0.0
  %799 = vmatpush2.msra.mxu0 0.0
  %800 = vmatprep.subr.mxu0 0.0
  %801 = vmatpush2.msra.mxu0 0.0
  %802 = vmatprep.subr.mxu0 0.0
  %803 = vmatpush2.msra.mxu0 0.0
  %804 = vmatprep.subr.mxu0 0.0
  %805 = vmatpush2.msra.mxu0 0.0
  %806 = vmatprep.subr.mxu0 0.0
  %807 = vmatpush2.msra.mxu0 0.0
  %808 = vmatprep.subr.mxu0 0.0
  %809 = vmatpush2.msra.mxu0 0.0
  %810 = vmatprep.subr.mxu0 0.0
  %811 = vmatpush2.msra.mxu0 0.0
  %812 = vmatprep.subr.mxu0 0.0
  %813 = vmatpush2.msra.mxu0 0.0
  %814 = vmatprep.subr.mxu0 0.0
  %815 = vmatpush2.msra.mxu0 0.0
  %816 = vmatprep.subr.mxu0 0.0
  %817 = vmatpush2.msra.mxu0 0.0
  %818 = vmatprep.subr.mxu0 0.0
  %819 = vmatpush2.msra.mxu0 0.0
  %820 = vmatprep.subr.mxu0 0.0
  %821 = vmatpush2.msra.mxu0 0.0
  %822 = vmatprep.subr.mxu0 0.0
  %823 = vmatpush2.msra.mxu0 0.0
  %824 = vmatprep.subr.mxu0 0.0
  %825 = vmatpush2.msra.mxu0 0.0
  %826 = vmatprep.subr.mxu0 0.0
  %827 = vmatpush2.msra.mxu0 0.0
  %828 = vmatprep.subr.mxu0 0.0
  %829 = vmatpush2.msra.mxu0 0.0
  %830 = vmatprep.mubr.f32.mxu0 0.0
  %831 = vmatmul.mubr.f32.gmra.mxu0 %v764
  %v832 = vpop.f32.mrf.mxu0
  %v833 = vadd.f32 %v760, %v832
  %v834 = vpop.f32.mrf.mxu0
  %835 = vdwg.mxu0
  %v836 = vmax.f32 %v833, 0.0
  %v837 = vld [vmem:[%s7] sm:$0xff]
  %v838 = vld [vmem:[%s7 + $0x8] sm:$0xff]
  %v839 = vld [vmem:[%s7 + $0x10] sm:$0xff]
  %v840 = vld [vmem:[#allocation2] sm:$0x1]
  %v842 = vlaneseq
  %v843 = vshrl.u32 %v842, 7
  %v844 = vsub.s32 0, %v843
  %v845 = vrot.slane %v840, %v844
  %vm847 = vcmask 195584
  %v849 = vsel %vm847, %v836, 0
  %851 = vmatprep.subr.mxu0 0.0
  %852 = vmatpush1.msra.mxu0 0.0
  %853 = vmatprep.subr.mxu0 0.0
  %854 = vmatpush1.msra.mxu0 0.0
  %855 = vmatprep.subr.mxu0 0.0
  %856 = vmatpush1.msra.mxu0 0.0
  %857 = vmatprep.subr.mxu0 0.0
  %858 = vmatpush1.msra.mxu0 0.0
  %859 = vmatprep.subr.mxu0 0.0
  %860 = vmatpush1.msra.mxu0 0.0
  %861 = vmatprep.subr.mxu0 0.0
  %862 = vmatpush1.msra.mxu0 0.0
  %863 = vmatprep.subr.mxu0 0.0
  %864 = vmatpush1.msra.mxu0 0.0
  %865 = vmatprep.subr.mxu0 0.0
  %866 = vmatpush1.msra.mxu0 0.0
  %867 = vmatprep.subr.mxu0 0.0
  %868 = vmatpush1.msra.mxu0 0.0
  %869 = vmatprep.subr.mxu0 0.0
  %870 = vmatpush1.msra.mxu0 0.0
  %871 = vmatprep.subr.mxu0 0.0
  %872 = vmatpush1.msra.mxu0 0.0
  %873 = vmatprep.subr.mxu0 0.0
  %874 = vmatpush1.msra.mxu0 0.0
  %875 = vmatprep.subr.mxu0 0.0
  %876 = vmatpush1.msra.mxu0 0.0
  %877 = vmatprep.subr.mxu0 0.0
  %878 = vmatpush1.msra.mxu0 %v839
  %879 = vmatprep.subr.mxu0 0.0
  %880 = vmatpush1.msra.mxu0 %v838
  %881 = vmatprep.subr.mxu0 0.0
  %882 = vmatpush1.msra.mxu0 %v837
  %883 = vmatprep.subr.mxu0 0.0
  %884 = vmatpush2.msra.mxu0 0.0
  %885 = vmatprep.subr.mxu0 0.0
  %886 = vmatpush2.msra.mxu0 0.0
  %887 = vmatprep.subr.mxu0 0.0
  %888 = vmatpush2.msra.mxu0 0.0
  %889 = vmatprep.subr.mxu0 0.0
  %890 = vmatpush2.msra.mxu0 0.0
  %891 = vmatprep.subr.mxu0 0.0
  %892 = vmatpush2.msra.mxu0 0.0
  %893 = vmatprep.subr.mxu0 0.0
  %894 = vmatpush2.msra.mxu0 0.0
  %895 = vmatprep.subr.mxu0 0.0
  %896 = vmatpush2.msra.mxu0 0.0
  %897 = vmatprep.subr.mxu0 0.0
  %898 = vmatpush2.msra.mxu0 0.0
  %899 = vmatprep.subr.mxu0 0.0
  %900 = vmatpush2.msra.mxu0 0.0
  %901 = vmatprep.subr.mxu0 0.0
  %902 = vmatpush2.msra.mxu0 0.0
  %903 = vmatprep.subr.mxu0 0.0
  %904 = vmatpush2.msra.mxu0 0.0
  %905 = vmatprep.subr.mxu0 0.0
  %906 = vmatpush2.msra.mxu0 0.0
  %907 = vmatprep.subr.mxu0 0.0
  %908 = vmatpush2.msra.mxu0 0.0
  %909 = vmatprep.subr.mxu0 0.0
  %910 = vmatpush2.msra.mxu0 0.0
  %911 = vmatprep.subr.mxu0 0.0
  %912 = vmatpush2.msra.mxu0 0.0
  %913 = vmatprep.subr.mxu0 0.0
  %914 = vmatpush2.msra.mxu0 0.0
  %915 = vmatprep.mubr.f32.mxu0 0.0
  %916 = vmatmul.mubr.f32.gmra.mxu0 %v849
  %v917 = vpop.f32.mrf.mxu0
  %v918 = vadd.f32 %v845, %v917
  %v919 = vpop.f32.mrf.mxu0
  %920 = vdwg.mxu0
  %vm921 = vcmask 5120
  %922 = vst.msk [vmem:[%s9] sm:$0x3f] %vm921, %v918
  // Predicated region
  $region38: #{feature_cnn2_forward.1} parent=0 // pred_check
    _
  $region39: #{feature_cnn2_forward.1} parent=0 // pred_check_branch
    %924 = sbr.rel (0) target = $region41
  $region40: #{feature_cnn2_forward.1} parent=0 // pred_region
    _
  $region41: #{feature_cnn2_forward.1} parent=0 // pred_fallthru
    _
  // Predicated region
  $region42: #{feature_cnn2_forward.1} parent=0 // pred_check
    _
  $region43: #{feature_cnn2_forward.1} parent=0 // pred_check_branch
    %926 = sbr.rel (0) target = $region45
  $region44: #{feature_cnn2_forward.1} parent=0 // pred_region
    _
  $region45: #{feature_cnn2_forward.1} parent=0 // pred_fallthru
    _

</llo_original>
